<compile_context>
chip_gen: v7x
topology: tpu7x:2x2x1
jax: 0.10.0
libtpu: 0.0.40
codegen_flags: <defaults>
</compile_context>

<pallas_src>
import functools

import jax
import jax.numpy as jnp
import numpy as np
from jax import lax
from jax.experimental import pallas as pl
from jax.experimental.pallas import tpu as pltpu


def _round_up(x, m):
    return (x + m - 1) // m * m


def _matmul_lrelu_kernel(x_ref, w_ref, o_ref, *, slope):
    # x_ref: [tm, Kp]   w_ref: [Kp, Np]   o_ref: [tm, Np]   (all lane-dense)
    acc = jnp.dot(x_ref[...], w_ref[...], preferred_element_type=jnp.float32)
    out = jnp.maximum(acc, slope * acc)          # LeakyReLU(slope), slope in (0,1)
    o_ref[...] = out.astype(o_ref.dtype)


def baselayer_forward(x_nchw, weight_oihw, *, stride, padding, slope=0.33):
    """Conv2d (no bias) + LeakyReLU, NCHW in / NCHW out, via Pallas."""
    N, C_in, H, W = x_nchw.shape
    C_out, C_in_w, KH, KW = weight_oihw.shape
    assert C_in_w == C_in

    Ho = (H + 2 * padding - KH) // stride + 1
    Wo = (W + 2 * padding - KW) // stride + 1

    # ---- wrapper-side layout plumbing (plain XLA glue) -----------------------
    # NCHW -> NHWC, spatial zero-pad.
    x_nhwc = jnp.transpose(x_nchw, (0, 2, 3, 1))
    x_pad = jnp.pad(x_nhwc, ((0, 0), (padding, padding),
                             (padding, padding), (0, 0)))

    # im2col: [N, Ho, Wo, KH*KW, C_in] -> [M, K] with M = N*Ho*Wo, K = KH*KW*C_in.
    windows = []
    for kh in range(KH):
        for kw in range(KW):
            windows.append(
                x_pad[:, kh:kh + (Ho - 1) * stride + 1:stride,
                         kw:kw + (Wo - 1) * stride + 1:stride, :])
    patches = jnp.stack(windows, axis=3)                      # [N,Ho,Wo,KH*KW,C_in]
    M = N * Ho * Wo
    K = KH * KW * C_in
    patches = patches.reshape(M, K)

    # Weight: OIHW -> [KH, KW, C_in, C_out] -> [K, C_out] (same feature order).
    w_mat = jnp.transpose(weight_oihw, (2, 3, 1, 0)).reshape(K, C_out)

    # Pad to lane-dense / MXU-friendly shapes: K, C_out -> multiples of 128,
    # M -> multiple of the tile size.
    Kp = _round_up(K, 128)
    Np = _round_up(C_out, 128)
    tm = 256 if M >= 1024 else 128
    Mp = _round_up(M, tm)

    patches = jnp.pad(patches, ((0, Mp - M), (0, Kp - K)))
    w_mat = jnp.pad(w_mat, ((0, Kp - K), (0, Np - C_out)))

    grid_m = Mp // tm

    kernel = functools.partial(_matmul_lrelu_kernel, slope=slope)

    out_flat = pl.pallas_call(
        kernel,
        out_shape=jax.ShapeDtypeStruct((Mp, Np), x_nchw.dtype),
        grid_spec=pltpu.PrefetchScalarGridSpec(
            num_scalar_prefetch=0,
            grid=(grid_m,),
            in_specs=[
                pl.BlockSpec((tm, Kp), lambda i: (i, 0)),      # im2col tile
                pl.BlockSpec((Kp, Np), lambda i: (0, 0)),      # weights (resident)
            ],
            out_specs=pl.BlockSpec((tm, Np), lambda i: (i, 0)),  # lane-dense store
        ),
        compiler_params=pltpu.CompilerParams(
            dimension_semantics=("parallel",)),
    )(patches, w_mat)

    # Strip padding, back to NCHW.
    out = out_flat[:M, :C_out].reshape(N, Ho, Wo, C_out)
    return jnp.transpose(out, (0, 3, 1, 2))


def _reference(x_nchw, weight_oihw, *, stride, padding, slope=0.33):
    y = lax.conv_general_dilated(
        x_nchw, weight_oihw,
        window_strides=(stride, stride),
        padding=((padding, padding), (padding, padding)),
        dimension_numbers=("NCHW", "OIHW", "NCHW"))
    return jnp.where(y >= 0.0, y, slope * y)


if __name__ == "__main__":
    # Baselayer(C_in=4, C_out=8, kernel_size=3, stride=1, padding=1)
    N, C_in, H, W = 2, 4, 16, 16
    C_out, K, stride, padding = 8, 3, 1, 1

    key = jax.random.PRNGKey(0)
    kx, kw = jax.random.split(key)
    x = jax.random.normal(kx, (N, C_in, H, W), dtype=jnp.float32)
    # Deterministic synthetic weight (Kaiming-ish scale), OIHW like PyTorch.
    fan_in = C_in * K * K
    weight = jax.random.normal(kw, (C_out, C_in, K, K), dtype=jnp.float32)
    weight = weight * (1.0 / np.sqrt(fan_in))

    out = baselayer_forward(x, weight, stride=stride, padding=padding)
    out = jax.block_until_ready(out)

    ref = _reference(x, weight, stride=stride, padding=padding)
    np.testing.assert_allclose(np.asarray(out), np.asarray(ref),
                               rtol=1e-5, atol=1e-5)
    assert out.shape == (N, C_out, H, W)
    print("KERNEL_OK")
</pallas_src>

<mosaic_0001>
module attributes {stable_mosaic.version = 11 : i64} {
  func.func @_matmul_lrelu_kernel(%arg0: i32, %arg1: memref<128x128xf32, #tpu.memory_space<vmem>>, %arg2: memref<128x128xf32, #tpu.memory_space<vmem>>, %arg3: memref<128x128xf32, #tpu.memory_space<vmem>>) attributes {dimension_semantics = [#tpu.dimension_semantics<parallel>], iteration_bounds = array<i64: 4>, scalar_prefetch = 0 : i64, scratch_operands = 0 : i64, tpu.core_type = #tpu.core_type<tc>, window_params = [{transform_indices = @transform_0, window_bounds = array<i64: 128, 128>}, {pipeline_mode = #tpu.pipeline_mode<synchronous>, transform_indices = @transform_1, window_bounds = array<i64: 128, 128>}, {transform_indices = @transform_2, window_bounds = array<i64: 128, 128>}]} {
    %c0 = arith.constant 0 : index
    %c0_0 = arith.constant 0 : index
    %0 = vector.load %arg1[%c0, %c0_0] : memref<128x128xf32, #tpu.memory_space<vmem>>, vector<128x128xf32>
    %c0_1 = arith.constant 0 : index
    %c0_2 = arith.constant 0 : index
    %1 = vector.load %arg2[%c0_1, %c0_2] : memref<128x128xf32, #tpu.memory_space<vmem>>, vector<128x128xf32>
    %cst = arith.constant dense<0.000000e+00> : vector<128x128xf32>
    %2 = tpu.matmul %0, %1, %cst {dimension_numbers = #tpu.dot_dimension_numbers<[1], [0], [0], [1], [0, 0, 1, 1], [], []>} : vector<128x128xf32>, vector<128x128xf32>, vector<128x128xf32> -> vector<128x128xf32>
    %cst_3 = arith.constant 3.300000e-01 : f32
    %3 = vector.broadcast %cst_3 : f32 to vector<128x128xf32>
    %4 = arith.mulf %3, %2 : vector<128x128xf32>
    %5 = arith.maximumf %2, %4 : vector<128x128xf32>
    %c0_4 = arith.constant 0 : index
    %c0_5 = arith.constant 0 : index
    %6 = vector.load %arg3[%c0_4, %c0_5] : memref<128x128xf32, #tpu.memory_space<vmem>>, vector<128x128xf32>
    tpu.vector_store %arg3[%c0_4, %c0_5], %5 {strides = array<i32>} : memref<128x128xf32, #tpu.memory_space<vmem>>, vector<128x128xf32>,
    return
  }
  func.func @transform_0(%arg0: i32) -> (i32, i32) {
    %c0_i32 = arith.constant 0 : i32
    %c0_i32_0 = arith.constant 0 : i32
    return %arg0, %c0_i32 : i32, i32
  }
  func.func @transform_1(%arg0: i32) -> (i32, i32) {
    %c0_i32 = arith.constant 0 : i32
    %c0_i32_0 = arith.constant 0 : i32
    %c0_i32_1 = arith.constant 0 : i32
    return %c0_i32, %c0_i32_0 : i32, i32
  }
  func.func @transform_2(%arg0: i32) -> (i32, i32) {
    %c0_i32 = arith.constant 0 : i32
    %c0_i32_0 = arith.constant 0 : i32
    return %arg0, %c0_i32 : i32, i32
  }
}

</mosaic_0001>

<llo_original>
// kernel: tpu_custom_call.1
$region0: #{tpu_custom_call.1}
  #allocation0 [shape = 'u32[]', space=smem, size = 0x4, offset = 0x4, fixed_abs, tag = 'smem constant byte address 0x4 - core index']
  #allocation1 [shape = 'u32[144,128]{1,0:T(1,128)}', space=vmem, size = 0x12000, scoped, tag = 'internal scratch']
  %s0 = inlined_call_operand.hbm [shape: f32[512,128], index: 0, kind: input, shape index: {}]
  %s1 = inlined_call_operand.hbm [shape: f32[128,128], index: 1, kind: input, shape index: {}]
  %s2 = inlined_call_operand.hbm [shape: f32[512,128], index: 2, kind: output, shape index: {}]
  %s3 = sld [smem:[#allocation0]]
  $region49: #{tpu_custom_call.1} parent=0
    _
  %s5 = ssub.s32 1, %s3
  %s6 = scalar_select 0, %s5, %s3
  $region1: #{tpu_custom_call.1} parent=0
    #allocation2 [shape = 'u8[131072]{0}', space=vmem, size = 0x20000, scoped, tag = 'input window, operand 0']
    #allocation3 [shape = 's32[2]{0}', space=sflag, size = 0x8, scoped, tag = 'scoped memory for tpu_custom_call.1']
    #allocation4 [shape = 's32[2]{0}', space=sflag, size = 0x8, scoped, tag = 'scoped memory for tpu_custom_call.1']
    #allocation5 [shape = 'u8[65536]{0}', space=vmem, size = 0x10000, scoped, tag = 'input window, operand 1, single buffered']
    #allocation6 [shape = 's32[1]{0}', space=sflag, size = 0x4, scoped, tag = 'scoped memory for tpu_custom_call.1']
    #allocation7 [shape = 'u8[131072]{0}', space=vmem, size = 0x20000, scoped, tag = 'output window, operand 0']
    %7 = vsyncpa [#allocation3], 0
    %s8 = scalar_lea.sflag [#allocation3], 1
    %9 = vsyncpa %s8, 0
    %10 = vsyncpa [#allocation6], 0
    %11 = vsyncpa [#allocation4], 0
    %s12 = scalar_lea.sflag [#allocation4], 1
    %13 = vsyncpa %s12, 0
    loop: start=0, step=1, limit=6
    $region2: #{tpu_custom_call.1} parent=1 // loop_pre_header
      _
    $region3: #{tpu_custom_call.1} parent=1 // loop_header
      %s15 = sphi 0, %s19
      %p16 = scmp.ge.s32.totalorder %s15, 6
      %s25 = sphi 0, %s27
      %s28 = sphi 0, %s25
      %s29 = sphi 0, %s28
      %s45 = sphi 0, %s29
      %s49 = sphi 0, %s49
      %s51 = sphi 0, %s49
      %s52 = sphi 0, %s51
      %s66 = sphi 0, %s52
      %s72 = sphi 0, %s74
      %s75 = sphi 0, %s72
      %s76 = sphi 0, %s75
      %s92 = sphi 0, %s76
    $region4: #{tpu_custom_call.1} parent=1 // loop_header_branch
      %18 = sbr.rel (%p16) target = $region8
    $region5: #{tpu_custom_call.1} parent=1 // loop_body
      %s20 = ssub.s32 %s15, 1
      %s21 = ssub.s32 %s15, 2
      %s22 = sadd.s32 %s15, 1
      %s23 = ssub.s32 %s15, %s22
      %p24 = scmp.eq.s32.totalorder %s23, 0
      %s26 = sadd.s32 %s25, 1
      %s27 = scalar_select %p24, %s25, %s26
      %p30 = pneg %p24
      %p31 = scmp.eq.s32.totalorder %s15, 3
      %p32 = por %p30, %p31
      %p33 = scmp.ne.s32.totalorder %s25, %s28
      %p34 = scmp.eq.s32.totalorder %s15, 0
      %p35 = por %p33, %p34
      %p36 = scmp.ne.s32.totalorder %s25, %s28
      %p37 = scmp.eq.s32.totalorder %s20, 3
      %p38 = por %p36, %p37
      %p39 = scmp.ne.s32.totalorder %s28, %s29
      %p40 = scmp.eq.s32.totalorder %s20, 0
      %p41 = por %p39, %p40
      %p42 = scmp.ne.s32.totalorder %s28, %s29
      %p43 = scmp.eq.s32.totalorder %s21, 3
      %p44 = por %p42, %p43
      %p46 = scmp.ne.s32.totalorder %s29, %s45
      %p47 = scmp.eq.s32.totalorder %s21, 0
      %p48 = por %p46, %p47
      %s50 = sadd.s32 %s49, 1
      %p53 = scmp.eq.s32.totalorder %s15, 3
      %p54 = scmp.ne.s32.totalorder %s49, %s51
      %p55 = scmp.eq.s32.totalorder %s15, 0
      %p56 = por %p54, %p55
      %p57 = scmp.ne.s32.totalorder %s49, %s51
      %p58 = scmp.eq.s32.totalorder %s20, 3
      %p59 = por %p57, %p58
      %p60 = scmp.ne.s32.totalorder %s51, %s52
      %p61 = scmp.eq.s32.totalorder %s20, 0
      %p62 = por %p60, %p61
      %p63 = scmp.ne.s32.totalorder %s51, %s52
      %p64 = scmp.eq.s32.totalorder %s21, 3
      %p65 = por %p63, %p64
      %p67 = scmp.ne.s32.totalorder %s52, %s66
      %p68 = scmp.eq.s32.totalorder %s21, 0
      %p69 = por %p67, %p68
      %s70 = ssub.s32 %s15, %s22
      %p71 = scmp.eq.s32.totalorder %s70, 0
      %s73 = sadd.s32 %s72, 1
      %s74 = scalar_select %p71, %s72, %s73
      %p77 = pneg %p71
      %p78 = scmp.eq.s32.totalorder %s15, 3
      %p79 = por %p77, %p78
      %p80 = scmp.ne.s32.totalorder %s72, %s75
      %p81 = scmp.eq.s32.totalorder %s15, 0
      %p82 = por %p80, %p81
      %p83 = scmp.ne.s32.totalorder %s72, %s75
      %p84 = scmp.eq.s32.totalorder %s20, 3
      %p85 = por %p83, %p84
      %p86 = scmp.ne.s32.totalorder %s75, %s76
      %p87 = scmp.eq.s32.totalorder %s20, 0
      %p88 = por %p86, %p87
      %p89 = scmp.ne.s32.totalorder %s75, %s76
      %p90 = scmp.eq.s32.totalorder %s21, 3
      %p91 = por %p89, %p90
      %p93 = scmp.ne.s32.totalorder %s76, %s92
      %p94 = scmp.eq.s32.totalorder %s21, 0
      %p95 = por %p93, %p94
      %p96 = scmp.le.s32.totalorder 1, %s15
      %p97 = scmp.lt.s32.totalorder %s15, 5
      %p98 = pnand %p96, %p97
      %p99 = pneg %p98
      // Predicated region
      $region9: #{tpu_custom_call.1} parent=5 // pred_check
        _
      $region10: #{tpu_custom_call.1} parent=5 // pred_check_branch
        %101 = sbr.rel (%p98) target = $region12
      $region11: #{tpu_custom_call.1} parent=5 // pred_region
        %s102 = ssub.s32 %s15, 1
        // Predicated region
        $region13: #{tpu_custom_call.1} parent=11 // pred_check
          %p103 = pneg %p62
        $region14: #{tpu_custom_call.1} parent=11 // pred_check_branch
          %105 = sbr.rel (%p103) target = $region16
        $region15: #{tpu_custom_call.1} parent=11 // pred_region
          %s107 = ssub.s32 2048, 2048
          %108 = vsyncadd [#allocation6], %s107
          %s109 = sshll.u32 [#allocation5], 4
          %s110 = int_to_ptr.vmem [resolvable:$true] %s109
          %115 = dma.hbm_to_vmem [thread:$0]  %s1, 2048, %s110, [#allocation6], 128, 128, 8
        $region16: #{tpu_custom_call.1} parent=11 // pred_fallthru
          _
      $region12: #{tpu_custom_call.1} parent=5 // pred_fallthru
        _
      %p116 = scmp.lt.s32.totalorder %s15, 4
      // Predicated region
      $region17: #{tpu_custom_call.1} parent=5 // pred_check
        %p117 = pneg %p116
      $region18: #{tpu_custom_call.1} parent=5 // pred_check_branch
        %119 = sbr.rel (%p117) target = $region20
      $region19: #{tpu_custom_call.1} parent=5 // pred_region
        // Predicated region
        $region21: #{tpu_custom_call.1} parent=19 // pred_check
          %p120 = pneg %p35
        $region22: #{tpu_custom_call.1} parent=19 // pred_check_branch
          %122 = sbr.rel (%p120) target = $region24
        $region23: #{tpu_custom_call.1} parent=19 // pred_region
          %s123 = sand.u32 %s25, 1
          %s124 = scalar_lea.sflag [#allocation3], %s123
          %s125 = sand.u32 %s25, 1
          %s126 = smul.addr %s125, 128
          %s127 = scalar_lea.vmem [#allocation2], %s126
          %s128 = smul.u32 16, %s15
          %s130 = ssub.s32 2048, 2048
          %131 = vsyncadd %s124, %s130
          %s132 = smul.addr %s128, 128
          %s133 = scalar_lea.hbm %s0, %s132
          %s134 = sshll.u32 %s127, 4
          %s135 = int_to_ptr.vmem [resolvable:$true] %s134
          %140 = dma.hbm_to_vmem [thread:$0]  %s133, 2048, %s135, %s124, 128, 128, 8
        $region24: #{tpu_custom_call.1} parent=19 // pred_fallthru
          _
      $region20: #{tpu_custom_call.1} parent=5 // pred_fallthru
        _
      %p141 = scmp.le.s32.totalorder 1, %s15
      %p142 = scmp.lt.s32.totalorder %s15, 5
      %p143 = pnand %p141, %p142
      %p144 = pneg %p143
      // Predicated region
      $region25: #{tpu_custom_call.1} parent=5 // pred_check
        _
      $region26: #{tpu_custom_call.1} parent=5 // pred_check_branch
        %146 = sbr.rel (%p143) target = $region28
      $region27: #{tpu_custom_call.1} parent=5 // pred_region
        %s147 = ssub.s32 %s15, 1
        %s148 = sand.u32 %s28, 1
        %s149 = scalar_lea.sflag [#allocation3], %s148
        %s150 = sand.u32 %s28, 1
        %s151 = smul.addr %s150, 128
        %s152 = scalar_lea.vmem [#allocation2], %s151
        // Predicated region
        $region29: #{tpu_custom_call.1} parent=27 // pred_check
          %p153 = pneg %p41
        $region30: #{tpu_custom_call.1} parent=27 // pred_check_branch
          %155 = sbr.rel (%p153) target = $region32
        $region31: #{tpu_custom_call.1} parent=27 // pred_region
          %156 = dma.done %s149, 2048
        $region32: #{tpu_custom_call.1} parent=27 // pred_fallthru
          _
        // Predicated region
        $region33: #{tpu_custom_call.1} parent=27 // pred_check
          %p157 = pneg %p62
        $region34: #{tpu_custom_call.1} parent=27 // pred_check_branch
          %159 = sbr.rel (%p157) target = $region36
        $region35: #{tpu_custom_call.1} parent=27 // pred_region
          %160 = dma.done [#allocation6], 2048
        $region36: #{tpu_custom_call.1} parent=27 // pred_fallthru
          _
        %s161 = sand.u32 %s28, 1
        %s162 = scalar_lea.sflag [#allocation3], %s161
        %s163 = sand.u32 %s28, 1
        %s164 = smul.addr %s163, 128
        %s165 = scalar_lea.vmem [#allocation2], %s164
        %p166 = pneg %p41
        %p167 = pneg %p38
        %p168 = pneg %p62
        %p169 = pneg %p59
        %p170 = pneg %p88
        %p171 = pneg %p85
        %s172 = sand.u32 %s75, 1
        %s173 = scalar_lea.sflag [#allocation4], %s172
        %s174 = sand.u32 %s75, 1
        %s175 = smul.addr %s174, 128
        %s176 = scalar_lea.vmem [#allocation7], %s175
        %s177 = smul.u32 16, %s20
        %s178 = smul.u32 16, %s20
        %v179 = vld [vmem:[%s152] sm:$0xff]
        %v180 = vld [vmem:[%s152 + $0x8] sm:$0xff]
        %v181 = vld [vmem:[%s152 + $0x10] sm:$0xff]
        %v182 = vld [vmem:[%s152 + $0x18] sm:$0xff]
        %v183 = vld [vmem:[%s152 + $0x20] sm:$0xff]
        %v184 = vld [vmem:[%s152 + $0x28] sm:$0xff]
        %v185 = vld [vmem:[%s152 + $0x30] sm:$0xff]
        %v186 = vld [vmem:[%s152 + $0x38] sm:$0xff]
        %v187 = vld [vmem:[%s152 + $0x40] sm:$0xff]
        %v188 = vld [vmem:[%s152 + $0x48] sm:$0xff]
        %v189 = vld [vmem:[%s152 + $0x50] sm:$0xff]
        %v190 = vld [vmem:[%s152 + $0x58] sm:$0xff]
        %v191 = vld [vmem:[%s152 + $0x60] sm:$0xff]
        %v192 = vld [vmem:[%s152 + $0x68] sm:$0xff]
        %v193 = vld [vmem:[%s152 + $0x70] sm:$0xff]
        %v194 = vld [vmem:[%s152 + $0x78] sm:$0xff]
        %v195 = vld [vmem:[#allocation5] sm:$0xff]
        %v196 = vld [vmem:[#allocation5 + $0x8] sm:$0xff]
        %v197 = vld [vmem:[#allocation5 + $0x10] sm:$0xff]
        %v198 = vld [vmem:[#allocation5 + $0x18] sm:$0xff]
        %v199 = vld [vmem:[#allocation5 + $0x20] sm:$0xff]
        %v200 = vld [vmem:[#allocation5 + $0x28] sm:$0xff]
        %v201 = vld [vmem:[#allocation5 + $0x30] sm:$0xff]
        %v202 = vld [vmem:[#allocation5 + $0x38] sm:$0xff]
        %v203 = vld [vmem:[#allocation5 + $0x40] sm:$0xff]
        %v204 = vld [vmem:[#allocation5 + $0x48] sm:$0xff]
        %v205 = vld [vmem:[#allocation5 + $0x50] sm:$0xff]
        %v206 = vld [vmem:[#allocation5 + $0x58] sm:$0xff]
        %v207 = vld [vmem:[#allocation5 + $0x60] sm:$0xff]
        %v208 = vld [vmem:[#allocation5 + $0x68] sm:$0xff]
        %v209 = vld [vmem:[#allocation5 + $0x70] sm:$0xff]
        %v210 = vld [vmem:[#allocation5 + $0x78] sm:$0xff]
        %211 = vmatprep.subr.mxu0 0.0
        %212 = vmatpush1.msra.mxu0 %v195
        %213 = vmatprep.subr.mxu0 0.0
        %214 = vmatpush1.msra.mxu0 %v196
        %215 = vmatprep.subr.mxu0 0.0
        %216 = vmatpush1.msra.mxu0 %v197
        %217 = vmatprep.subr.mxu0 0.0
        %218 = vmatpush1.msra.mxu0 %v198
        %219 = vmatprep.subr.mxu0 0.0
        %220 = vmatpush1.msra.mxu0 %v199
        %221 = vmatprep.subr.mxu0 0.0
        %222 = vmatpush1.msra.mxu0 %v200
        %223 = vmatprep.subr.mxu0 0.0
        %224 = vmatpush1.msra.mxu0 %v201
        %225 = vmatprep.subr.mxu0 0.0
        %226 = vmatpush1.msra.mxu0 %v202
        %227 = vmatprep.subr.mxu0 0.0
        %228 = vmatpush1.msra.mxu0 %v203
        %229 = vmatprep.subr.mxu0 0.0
        %230 = vmatpush1.msra.mxu0 %v204
        %231 = vmatprep.subr.mxu0 0.0
        %232 = vmatpush1.msra.mxu0 %v205
        %233 = vmatprep.subr.mxu0 0.0
        %234 = vmatpush1.msra.mxu0 %v206
        %235 = vmatprep.subr.mxu0 0.0
        %236 = vmatpush1.msra.mxu0 %v207
        %237 = vmatprep.subr.mxu0 0.0
        %238 = vmatpush1.msra.mxu0 %v208
        %239 = vmatprep.subr.mxu0 0.0
        %240 = vmatpush1.msra.mxu0 %v209
        %241 = vmatprep.subr.mxu0 0.0
        %242 = vmatpush1.msra.mxu0 %v210
        %243 = vmatprep.subr.mxu0 0.0
        %244 = vmatpush1.msra.mxu0 0.0
        %245 = vmatprep.subr.mxu0 0.0
        %246 = vmatpush1.msra.mxu0 0.0
        %247 = vmatprep.subr.mxu0 0.0
        %248 = vmatpush1.msra.mxu0 0.0
        %249 = vmatprep.subr.mxu0 0.0
        %250 = vmatpush1.msra.mxu0 0.0
        %251 = vmatprep.subr.mxu0 0.0
        %252 = vmatpush1.msra.mxu0 0.0
        %253 = vmatprep.subr.mxu0 0.0
        %254 = vmatpush1.msra.mxu0 0.0
        %255 = vmatprep.subr.mxu0 0.0
        %256 = vmatpush1.msra.mxu0 0.0
        %257 = vmatprep.subr.mxu0 0.0
        %258 = vmatpush1.msra.mxu0 0.0
        %259 = vmatprep.subr.mxu0 0.0
        %260 = vmatpush1.msra.mxu0 0.0
        %261 = vmatprep.subr.mxu0 0.0
        %262 = vmatpush1.msra.mxu0 0.0
        %263 = vmatprep.subr.mxu0 0.0
        %264 = vmatpush1.msra.mxu0 0.0
        %265 = vmatprep.subr.mxu0 0.0
        %266 = vmatpush1.msra.mxu0 0.0
        %267 = vmatprep.subr.mxu0 0.0
        %268 = vmatpush1.msra.mxu0 0.0
        %269 = vmatprep.subr.mxu0 0.0
        %270 = vmatpush1.msra.mxu0 0.0
        %271 = vmatprep.subr.mxu0 0.0
        %272 = vmatpush1.msra.mxu0 0.0
        %273 = vmatprep.subr.mxu0 0.0
        %274 = vmatpush1.msra.mxu0 0.0
        %275 = vmatprep.mubr.f32.mxu0 0.0
        %276 = vmatmul.mubr.f32.gmra.mrb[0].mxu0 %v179
        %v277 = vpop.f32.mrb[0].mxu0
        %v278 = vadd.f32 0.0, %v277
        %v279 = vpop.f32.mrb[0].mxu0
        %280 = vmatprep.mubr.f32.mxu0 0.0
        %281 = vmatmul.mubr.f32.gmra.mrb[0].mxu0 %v180
        %v282 = vpop.f32.mrb[0].mxu0
        %v283 = vadd.f32 0.0, %v282
        %v284 = vpop.f32.mrb[0].mxu0
        %285 = vmatprep.mubr.f32.mxu0 0.0
        %286 = vmatmul.mubr.f32.gmra.mrb[0].mxu0 %v181
        %v287 = vpop.f32.mrb[0].mxu0
        %v288 = vadd.f32 0.0, %v287
        %v289 = vpop.f32.mrb[0].mxu0
        %290 = vmatprep.mubr.f32.mxu0 0.0
        %291 = vmatmul.mubr.f32.gmra.mrb[0].mxu0 %v182
        %v292 = vpop.f32.mrb[0].mxu0
        %v293 = vadd.f32 0.0, %v292
        %v294 = vpop.f32.mrb[0].mxu0
        %295 = vmatprep.mubr.f32.mxu0 0.0
        %296 = vmatmul.mubr.f32.gmra.mrb[0].mxu0 %v183
        %v297 = vpop.f32.mrb[0].mxu0
        %v298 = vadd.f32 0.0, %v297
        %v299 = vpop.f32.mrb[0].mxu0
        %300 = vmatprep.mubr.f32.mxu0 0.0
        %301 = vmatmul.mubr.f32.gmra.mrb[0].mxu0 %v184
        %v302 = vpop.f32.mrb[0].mxu0
        %v303 = vadd.f32 0.0, %v302
        %v304 = vpop.f32.mrb[0].mxu0
        %305 = vmatprep.mubr.f32.mxu0 0.0
        %306 = vmatmul.mubr.f32.gmra.mrb[0].mxu0 %v185
        %v307 = vpop.f32.mrb[0].mxu0
        %v308 = vadd.f32 0.0, %v307
        %v309 = vpop.f32.mrb[0].mxu0
        %310 = vmatprep.mubr.f32.mxu0 0.0
        %311 = vmatmul.mubr.f32.gmra.mrb[0].mxu0 %v186
        %v312 = vpop.f32.mrb[0].mxu0
        %v313 = vadd.f32 0.0, %v312
        %v314 = vpop.f32.mrb[0].mxu0
        %315 = vmatprep.mubr.f32.mxu0 0.0
        %316 = vmatmul.mubr.f32.gmra.mrb[0].mxu0 %v187
        %v317 = vpop.f32.mrb[0].mxu0
        %v318 = vadd.f32 0.0, %v317
        %v319 = vpop.f32.mrb[0].mxu0
        %320 = vmatprep.mubr.f32.mxu0 0.0
        %321 = vmatmul.mubr.f32.gmra.mrb[0].mxu0 %v188
        %v322 = vpop.f32.mrb[0].mxu0
        %v323 = vadd.f32 0.0, %v322
        %v324 = vpop.f32.mrb[0].mxu0
        %325 = vmatprep.mubr.f32.mxu0 0.0
        %326 = vmatmul.mubr.f32.gmra.mrb[0].mxu0 %v189
        %v327 = vpop.f32.mrb[0].mxu0
        %v328 = vadd.f32 0.0, %v327
        %v329 = vpop.f32.mrb[0].mxu0
        %330 = vmatprep.mubr.f32.mxu0 0.0
        %331 = vmatmul.mubr.f32.gmra.mrb[0].mxu0 %v190
        %v332 = vpop.f32.mrb[0].mxu0
        %v333 = vadd.f32 0.0, %v332
        %v334 = vpop.f32.mrb[0].mxu0
        %335 = vmatprep.mubr.f32.mxu0 0.0
        %336 = vmatmul.mubr.f32.gmra.mrb[0].mxu0 %v191
        %v337 = vpop.f32.mrb[0].mxu0
        %v338 = vadd.f32 0.0, %v337
        %v339 = vpop.f32.mrb[0].mxu0
        %340 = vmatprep.mubr.f32.mxu0 0.0
        %341 = vmatmul.mubr.f32.gmra.mrb[0].mxu0 %v192
        %v342 = vpop.f32.mrb[0].mxu0
        %v343 = vadd.f32 0.0, %v342
        %v344 = vpop.f32.mrb[0].mxu0
        %345 = vmatprep.mubr.f32.mxu0 0.0
        %346 = vmatmul.mubr.f32.gmra.mrb[0].mxu0 %v193
        %v347 = vpop.f32.mrb[0].mxu0
        %v348 = vadd.f32 0.0, %v347
        %v349 = vpop.f32.mrb[0].mxu0
        %350 = vmatprep.mubr.f32.mxu0 0.0
        %351 = vmatmul.mubr.f32.gmra.mrb[0].mxu0 %v194
        %v352 = vpop.f32.mrb[0].mxu0
        %v353 = vadd.f32 0.0, %v352
        %v354 = vpop.f32.mrb[0].mxu0
        %355 = vdwg.mxu0
        %v356 = vmul.f32 %v278, 0.33
        %v357 = vmul.f32 %v283, 0.33
        %v358 = vmul.f32 %v288, 0.33
        %v359 = vmul.f32 %v293, 0.33
        %v360 = vmul.f32 %v298, 0.33
        %v361 = vmul.f32 %v303, 0.33
        %v362 = vmul.f32 %v308, 0.33
        %v363 = vmul.f32 %v313, 0.33
        %v364 = vmul.f32 %v318, 0.33
        %v365 = vmul.f32 %v323, 0.33
        %v366 = vmul.f32 %v328, 0.33
        %v367 = vmul.f32 %v333, 0.33
        %v368 = vmul.f32 %v338, 0.33
        %v369 = vmul.f32 %v343, 0.33
        %v370 = vmul.f32 %v348, 0.33
        %v371 = vmul.f32 %v353, 0.33
        %v372 = vmax.f32 %v278, %v356
        %v373 = vmax.f32 %v283, %v357
        %v374 = vmax.f32 %v288, %v358
        %v375 = vmax.f32 %v293, %v359
        %v376 = vmax.f32 %v298, %v360
        %v377 = vmax.f32 %v303, %v361
        %v378 = vmax.f32 %v308, %v362
        %v379 = vmax.f32 %v313, %v363
        %v380 = vmax.f32 %v318, %v364
        %v381 = vmax.f32 %v323, %v365
        %v382 = vmax.f32 %v328, %v366
        %v383 = vmax.f32 %v333, %v367
        %v384 = vmax.f32 %v338, %v368
        %v385 = vmax.f32 %v343, %v369
        %v386 = vmax.f32 %v348, %v370
        %v387 = vmax.f32 %v353, %v371
        %388 = vst [vmem:[%s176] sm:$0xff] %v372
        %389 = vst [vmem:[%s176 + $0x8] sm:$0xff] %v373
        %390 = vst [vmem:[%s176 + $0x10] sm:$0xff] %v374
        %391 = vst [vmem:[%s176 + $0x18] sm:$0xff] %v375
        %392 = vst [vmem:[%s176 + $0x20] sm:$0xff] %v376
        %393 = vst [vmem:[%s176 + $0x28] sm:$0xff] %v377
        %394 = vst [vmem:[%s176 + $0x30] sm:$0xff] %v378
        %395 = vst [vmem:[%s176 + $0x38] sm:$0xff] %v379
        %396 = vst [vmem:[%s176 + $0x40] sm:$0xff] %v380
        %397 = vst [vmem:[%s176 + $0x48] sm:$0xff] %v381
        %398 = vst [vmem:[%s176 + $0x50] sm:$0xff] %v382
        %399 = vst [vmem:[%s176 + $0x58] sm:$0xff] %v383
        %400 = vst [vmem:[%s176 + $0x60] sm:$0xff] %v384
        %401 = vst [vmem:[%s176 + $0x68] sm:$0xff] %v385
        %402 = vst [vmem:[%s176 + $0x70] sm:$0xff] %v386
        %403 = vst [vmem:[%s176 + $0x78] sm:$0xff] %v387
        %s404 = sand.u32 %s75, 1
        %s405 = scalar_lea.sflag [#allocation4], %s404
        %s406 = sand.u32 %s75, 1
        %s407 = smul.addr %s406, 128
        %s408 = scalar_lea.vmem [#allocation7], %s407
        // Predicated region
        $region37: #{tpu_custom_call.1} parent=27 // pred_check
          %p409 = pneg %p85
        $region38: #{tpu_custom_call.1} parent=27 // pred_check_branch
          %411 = sbr.rel (%p409) target = $region40
        $region39: #{tpu_custom_call.1} parent=27 // pred_region
          %s412 = smul.u32 16, %s20
          %s414 = ssub.s32 2048, 2048
          %415 = vsyncadd %s405, %s414
          %s416 = smul.addr %s412, 128
          %s417 = scalar_lea.hbm %s2, %s416
          %s418 = sshll.u32 %s408, 4
          %s419 = int_to_ptr.vmem [resolvable:$true] %s418
          %424 = dma.vmem_to_hbm [thread:$0]  %s419, 2048, %s417, %s405, 128, 128, 8
        $region40: #{tpu_custom_call.1} parent=27 // pred_fallthru
          _
      $region28: #{tpu_custom_call.1} parent=5 // pred_fallthru
        _
      %p425 = scmp.le.s32.totalorder 2, %s15
      // Predicated region
      $region41: #{tpu_custom_call.1} parent=5 // pred_check
        %p426 = pneg %p425
      $region42: #{tpu_custom_call.1} parent=5 // pred_check_branch
        %428 = sbr.rel (%p426) target = $region44
      $region43: #{tpu_custom_call.1} parent=5 // pred_region
        %s429 = ssub.s32 %s15, 2
        // Predicated region
        $region45: #{tpu_custom_call.1} parent=43 // pred_check
          %p430 = pneg %p91
        $region46: #{tpu_custom_call.1} parent=43 // pred_check_branch
          %432 = sbr.rel (%p430) target = $region48
        $region47: #{tpu_custom_call.1} parent=43 // pred_region
          %s433 = sand.u32 %s76, 1
          %s434 = scalar_lea.sflag [#allocation4], %s433
          %s435 = sand.u32 %s76, 1
          %s436 = smul.addr %s435, 128
          %s437 = scalar_lea.vmem [#allocation7], %s436
          %438 = dma.done %s434, 2048
        $region48: #{tpu_custom_call.1} parent=43 // pred_fallthru
          _
      $region44: #{tpu_custom_call.1} parent=5 // pred_fallthru
        _
    $region6: #{tpu_custom_call.1} parent=1 // loop_footer
      %s19 = sadd.s32 1, %s15
    $region7: #{tpu_custom_call.1} parent=1 // loop_footer_branch
      %14 = sbr.rel target = $region3
    $region8: #{tpu_custom_call.1} parent=1 // loop_exit
      _
    %439 = vsyncpa [#allocation3], 1
    %s440 = scalar_lea.sflag [#allocation3], 1
    %441 = vsyncpa %s440, 1
    %442 = vsyncpa [#allocation6], 1
    %443 = vsyncpa [#allocation4], 1
    %s444 = scalar_lea.sflag [#allocation4], 1
    %445 = vsyncpa %s444, 1

</llo_original>
